<compile_context>
chip_gen: v5e
topology: v5e:2x2
jax: 0.10.0
libtpu: 0.0.40
codegen_flags: <defaults>
</compile_context>

<pallas_src>
import math

import numpy as np
import jax
import jax.numpy as jnp
from jax import lax
from jax.experimental import pallas as pl
from jax.experimental.pallas import tpu as pltpu


# ---------------- elementwise helpers (match torch activations) ----------------
def _elu(x):
    return jnp.where(x > 0, x, jnp.exp(x) - 1.0)


def _sigmoid(x):
    return 1.0 / (1.0 + jnp.exp(-x))


def _softplus(x):  # torch.nn.Softplus(beta=1, threshold=20)
    return jnp.where(x > 20.0, x, jnp.log(1.0 + jnp.exp(jnp.minimum(x, 20.0))))


# ---------------- host-side weight transform: 3x3 conv -> row-banded matmul ----
def _band_from_hwio(w_hwio, W):
    """(3,3,Cin,Cout) HWIO -> (3, W*Cin, W*Cout) banded weight (one per dy).

    Operands use the fused (W, C) lane layout, so one (rows, W*Cin)x(W*Cin, W*Cout)
    matmul per dy computes a full conv row; W-boundary zeros live in the band."""
    kH, kW, Cin, Cout = w_hwio.shape
    band = np.zeros((kH, W * Cin, W * Cout), np.float32)
    w = np.asarray(w_hwio, np.float32)
    for dy in range(kH):
        for j in range(W):
            for dx in range(kW):
                jj = j + dx - 1
                if 0 <= jj < W:
                    band[dy, jj * Cin:(jj + 1) * Cin, j * Cout:(j + 1) * Cout] = w[dy, dx]
    return band


# ---------------- kernel 1: fused node-conv + edge-conv over atom blocks -------
def _fused_conv_kernel(x_ref, w_ref, node_ref, edge_ref, hpad_ref):
    # x_ref: (NB, H, W*C) lane-dense atoms;  w_ref: (3, W*C, 2*W*C) fused band
    NB, H, L = x_ref.shape
    F = w_ref.shape[2]
    half = F // 2

    # in-kernel H halo (no host jnp.pad): zero border rows once, copy interior
    @pl.when(pl.program_id(0) == 0)
    def _():
        hpad_ref[:, 0:1, :] = jnp.zeros((NB, 1, L), jnp.float32)
        hpad_ref[:, H + 1:H + 2, :] = jnp.zeros((NB, 1, L), jnp.float32)

    hpad_ref[:, 1:H + 1, :] = x_ref[...]

    acc = jnp.zeros((NB * H, F), jnp.float32)
    for dy in range(3):  # 3 matmuls, K=W*C=128, N=256 (node|edge fused)
        xs = hpad_ref[:, dy:dy + H, :].reshape(NB * H, L)
        acc = acc + jnp.dot(xs, w_ref[dy], preferred_element_type=jnp.float32)

    node_ref[...] = acc[:, :half].reshape(NB, H, half)
    edge_ref[...] = acc[:, half:].reshape(NB, H, half)


def fused_node_edge_conv(x, w1_band, *, nb=8):
    Np, H, L = x.shape
    F = w1_band.shape[2]
    half = F // 2
    return pl.pallas_call(
        _fused_conv_kernel,
        out_shape=(jax.ShapeDtypeStruct((Np, H, half), jnp.float32),
                   jax.ShapeDtypeStruct((Np, H, half), jnp.float32)),
        grid_spec=pltpu.PrefetchScalarGridSpec(
            num_scalar_prefetch=0,
            grid=(Np // nb,),
            in_specs=[
                pl.BlockSpec((nb, H, L), lambda i: (i, 0, 0)),
                pl.BlockSpec((3, L, F), lambda i: (0, 0, 0)),
            ],
            out_specs=[
                pl.BlockSpec((nb, H, half), lambda i: (i, 0, 0)),
                pl.BlockSpec((nb, H, half), lambda i: (i, 0, 0)),
            ],
            scratch_shapes=[pltpu.VMEM((nb, H + 2, L), jnp.float32)],
        ),
        compiler_params=pltpu.CompilerParams(dimension_semantics=("parallel",)),
    )(x, w1_band)


# ---------------- kernel 2: batched edge messages with double-buffered gathers -
def _edge_msg_kernel(src_ref, tgt_ref,            # scalar-prefetch indices (SMEM)
                     node_hbm, edge_hbm,          # conv outputs left in HBM (ANY)
                     w_ref, b_ref,                # banded linear weight + fused bias
                     msg_ref,                     # out block (EB, H, W*C)
                     abuf, bbuf, zpad_ref, sems):
    _, EB, H, L = abuf.shape
    F = w_ref.shape[2]
    half = F // 2
    e = pl.program_id(0)
    nsteps = pl.num_programs(0)
    slot = lax.rem(e, 2)

    def issue_gathers(block, s):
        base = block * EB
        for i in range(EB):  # static unroll; all DMAs in flight concurrently
            pltpu.make_async_copy(node_hbm.at[src_ref[base + i]],
                                  abuf.at[s, i], sems.at[0, s, i]).start()
            pltpu.make_async_copy(edge_hbm.at[tgt_ref[base + i]],
                                  bbuf.at[s, i], sems.at[1, s, i]).start()

    @pl.when(e == 0)                       # prime slot 0 + zero halo borders once
    def _():
        issue_gathers(0, 0)
        zpad_ref[:, 0:1, :] = jnp.zeros((EB, 1, L), jnp.float32)
        zpad_ref[:, H + 1:H + 2, :] = jnp.zeros((EB, 1, L), jnp.float32)

    @pl.when(e + 1 < nsteps)               # prefetch next edge block into other slot
    def _():
        issue_gathers(e + 1, 1 - slot)

    for i in range(EB):                    # wait for this block's gathers
        pltpu.make_async_copy(node_hbm.at[0], abuf.at[slot, i], sems.at[0, slot, i]).wait()
        pltpu.make_async_copy(edge_hbm.at[0], bbuf.at[slot, i], sems.at[1, slot, i]).wait()

    # z = ELU(node_conv(atom)[src] * edge_conv(atom)[tgt])
    z = _elu(abuf[slot] * bbuf[slot])      # (EB, H, L)
    zpad_ref[:, 1:H + 1, :] = z

    # Conv2d(16->32)+bias as 3 banded matmuls, bias folded into the acc init
    acc = jnp.broadcast_to(b_ref[...], (EB * H, F))
    for dy in range(3):
        xs = zpad_ref[:, dy:dy + H, :].reshape(EB * H, L)
        acc = acc + jnp.dot(xs, w_ref[dy], preferred_element_type=jnp.float32)

    # filter|core halves are pre-de-interleaved in the band -> tile-aligned slices
    gate = _sigmoid(acc[:, :half]) * _softplus(acc[:, half:])   # (EB*H, W*C)
    msg_ref[...] = gate.reshape(EB, H, half)


def edge_messages(node_out, edge_out, src_idx, tgt_idx, w2_band, b2_fused, *, eb=16):
    Np, H, L = node_out.shape
    Ep = src_idx.shape[0]
    F = w2_band.shape[2]
    half = F // 2
    return pl.pallas_call(
        _edge_msg_kernel,
        out_shape=jax.ShapeDtypeStruct((Ep, H, half), jnp.float32),
        grid_spec=pltpu.PrefetchScalarGridSpec(
            num_scalar_prefetch=2,
            grid=(Ep // eb,),
            in_specs=[
                pl.BlockSpec(memory_space=pl.ANY),                 # node_out (HBM)
                pl.BlockSpec(memory_space=pl.ANY),                 # edge_out (HBM)
                pl.BlockSpec((3, L, F), lambda e, s, t: (0, 0, 0)),
                pl.BlockSpec((1, F), lambda e, s, t: (0, 0)),
            ],
            out_specs=pl.BlockSpec((eb, H, half), lambda e, s, t: (e, 0, 0)),
            scratch_shapes=[
                pltpu.VMEM((2, eb, H, L), jnp.float32),            # gathered node rows
                pltpu.VMEM((2, eb, H, L), jnp.float32),            # gathered edge rows
                pltpu.VMEM((eb, H + 2, L), jnp.float32),           # H halo for 3x3 conv
                pltpu.SemaphoreType.DMA((2, 2, eb)),
            ],
        ),
        # cross-step double buffering requires sequential grid execution
        compiler_params=pltpu.CompilerParams(dimension_semantics=("arbitrary",)),
    )(src_idx, tgt_idx, node_out, edge_out, w2_band, b2_fused)


# ---------------- kernel 3: scatter-add as one-hot MXU matmul + BN statistics --
def _scatter_stats_kernel(atom_ref, code_ref, msg_ref, out_ref, stats_ref):
    NB, H, L = atom_ref.shape
    EB, _, _ = msg_ref.shape
    R = NB * H
    Q = EB * H
    i = pl.program_id(0)
    k = pl.program_id(1)
    nk = pl.num_programs(1)

    @pl.when(k == 0)
    def _():
        out_ref[...] = atom_ref[...]       # output = atom.clone()

    # one-hot selection: row code of (atom n, image row h) is n*H + h;
    # code_ref holds src[e]*H + h per msg row (-1 for padded edges).
    row_code = lax.broadcasted_iota(jnp.int32, (R, 1), 0) + i * R
    onehot = (row_code == code_ref[...]).astype(jnp.float32)          # (R, Q)
    contrib = jnp.dot(onehot, msg_ref[...].reshape(Q, L),
                      preferred_element_type=jnp.float32)             # (R, L)
    out_ref[...] = out_ref[...] + contrib.reshape(NB, H, L)

    @pl.when(k == nk - 1)                  # per-lane sum / sumsq for BatchNorm2d
    def _():
        o = out_ref[...].reshape(R, L)
        s1 = jnp.sum(o, axis=0, keepdims=True)
        s2 = jnp.sum(o * o, axis=0, keepdims=True)
        blk = jnp.concatenate([s1, s2], axis=0)                       # (2, L)
        prev = jnp.where(i == 0, jnp.zeros_like(blk), stats_ref[...])
        stats_ref[...] = prev + blk


def scatter_and_stats(atom_g, msg, srccode, *, nb=8, ebs=32):
    Np, H, L = atom_g.shape
    Ep = msg.shape[0]
    return pl.pallas_call(
        _scatter_stats_kernel,
        out_shape=(jax.ShapeDtypeStruct((Np, H, L), jnp.float32),
                   jax.ShapeDtypeStruct((2, L), jnp.float32)),
        grid_spec=pltpu.PrefetchScalarGridSpec(
            num_scalar_prefetch=0,
            grid=(Np // nb, Ep // ebs),
            in_specs=[
                pl.BlockSpec((nb, H, L), lambda i, k: (i, 0, 0)),
                pl.BlockSpec((1, ebs * H), lambda i, k: (0, k)),
                pl.BlockSpec((ebs, H, L), lambda i, k: (k, 0, 0)),
            ],
            out_specs=[
                pl.BlockSpec((nb, H, L), lambda i, k: (i, 0, 0)),
                pl.BlockSpec((2, L), lambda i, k: (0, 0)),
            ],
        ),
        compiler_params=pltpu.CompilerParams(
            dimension_semantics=("arbitrary", "arbitrary")),
    )(atom_g, srccode, msg)


# ---------------- kernel 4: apply BatchNorm (batch stats) + softplus ------------
def _bn_softplus_kernel(atom_ref, out0_ref, mean_ref, istd_ref, o_ref):
    bn = (out0_ref[...] - mean_ref[...]) * istd_ref[...]
    o_ref[...] = _softplus(atom_ref[...] + bn)


def bn_softplus(atom_g, out0, mean_b, istd_b, *, nb=8):
    Np, H, L = atom_g.shape
    return pl.pallas_call(
        _bn_softplus_kernel,
        out_shape=jax.ShapeDtypeStruct((Np, H, L), jnp.float32),
        grid_spec=pltpu.PrefetchScalarGridSpec(
            num_scalar_prefetch=0,
            grid=(Np // nb,),
            in_specs=[
                pl.BlockSpec((nb, H, L), lambda i: (i, 0, 0)),
                pl.BlockSpec((nb, H, L), lambda i: (i, 0, 0)),
                pl.BlockSpec((1, L), lambda i: (0, 0)),
                pl.BlockSpec((1, L), lambda i: (0, 0)),
            ],
            out_specs=pl.BlockSpec((nb, H, L), lambda i: (i, 0, 0)),
        ),
        compiler_params=pltpu.CompilerParams(dimension_semantics=("parallel",)),
    )(atom_g, out0, mean_b, istd_b)


# ---------------- full ConvLayer forward ----------------
def conv_layer_forward(params, atom_in_fea, edge_sources, edge_targets, *,
                       nb=8, eb_gather=16, eb_scatter=32):
    N, H, W, C = atom_in_fea.shape
    L = W * C                    # fused lane axis (= 128 for 8x8x16)
    E = edge_sources.shape[0]

    # ---- host-side layout plumbing: lane-dense (H, W*C) view + block padding ----
    Np = -(-N // nb) * nb
    em = math.lcm(eb_gather, eb_scatter)
    Ep = -(-E // em) * em

    atom_g = atom_in_fea.reshape(N, H, L)
    if Np > N:
        atom_g = jnp.pad(atom_g, ((0, Np - N), (0, 0), (0, 0)))

    src = edge_sources.astype(jnp.int32)
    tgt = edge_targets.astype(jnp.int32)
    src_p = jnp.pad(src, (0, Ep - E))        # padded gathers hit (valid) atom 0
    tgt_p = jnp.pad(tgt, (0, Ep - E))
    valid = jnp.arange(Ep, dtype=jnp.int32) < E
    hh = jnp.arange(H, dtype=jnp.int32)
    codes = src_p[:, None] * H + hh[None, :]
    codes = jnp.where(valid[:, None], codes, -1)   # padded edges never scatter
    srccode = codes.reshape(1, Ep * H).astype(jnp.int32)

    # ---- kernel 1: fused node+edge 3x3 convs on atom blocks ----
    node_out, edge_out = fused_node_edge_conv(atom_g, params["w1_band"], nb=nb)

    # ---- kernel 2: gather + ELU(a*b) + Conv2d(16->32)+bias + sigmoid*softplus ----
    msg = edge_messages(node_out, edge_out, src_p, tgt_p,
                        params["w2_band"], params["b2_fused"], eb=eb_gather)

    # ---- kernel 3: index_add_ as one-hot matmul + BN sum/sumsq accumulation ----
    out0, stats = scatter_and_stats(atom_g, msg, srccode, nb=nb, ebs=eb_scatter)

    # ---- BatchNorm2d(16) training-mode stat finalization (2x128 floats) ----
    cnt = float(N * H * W)
    sum_c = stats[0].reshape(W, C).sum(axis=0)
    sq_c = stats[1].reshape(W, C).sum(axis=0)
    mean_c = sum_c / cnt
    var_c = jnp.maximum(sq_c / cnt - mean_c * mean_c, 0.0)   # biased variance
    istd_c = lax.rsqrt(var_c + 1e-5)
    mean_b = jnp.tile(mean_c, W).reshape(1, L)
    istd_b = jnp.tile(istd_c, W).reshape(1, L)

    # ---- kernel 4: out = softplus(atom + BN(output)) ----
    out = bn_softplus(atom_g, out0, mean_b, istd_b, nb=nb)
    return out[:N].reshape(N, H, W, C)


# ---------------- deterministic parameter init (shapes from __init__) ----------
def init_params(key, *, W=8, Cin=16):
    k1, k2, k3, k4 = jax.random.split(key, 4)
    scale = 0.1
    w_node = jax.random.normal(k1, (3, 3, Cin, Cin), jnp.float32) * scale      # edgenet.node_linears[0]
    w_edge = jax.random.normal(k2, (3, 3, Cin, Cin), jnp.float32) * scale      # edgenet.edge_linears[0]
    w_lin = jax.random.normal(k3, (3, 3, Cin, 2 * Cin), jnp.float32) * scale   # self.linear (16->32)
    b_lin = jax.random.normal(k4, (2 * Cin,), jnp.float32) * scale

    band_node = _band_from_hwio(w_node, W)                     # (3, 128, 128)
    band_edge = _band_from_hwio(w_edge, W)
    band_filt = _band_from_hwio(w_lin[..., :Cin], W)           # filter half of linear
    band_core = _band_from_hwio(w_lin[..., Cin:], W)           # core half of linear
    b_np = np.asarray(b_lin, np.float32)
    b2 = np.concatenate([np.tile(b_np[:Cin], W), np.tile(b_np[Cin:], W)])[None, :]

    return {
        # Pallas-facing (banded, fused, lane-dense) parameters
        "w1_band": jnp.asarray(np.concatenate([band_node, band_edge], axis=2)),  # (3,128,256)
        "w2_band": jnp.asarray(np.concatenate([band_filt, band_core], axis=2)),  # (3,128,256)
        "b2_fused": jnp.asarray(b2),                                             # (1,256)
        # raw HWIO weights for the pure-JAX reference
        "w_node_hwio": w_node,
        "w_edge_hwio": w_edge,
        "w_lin_hwio": w_lin,
        "b_lin": b_lin,
    }


# ---------------- pure-JAX reference for correctness ----------------
def reference_forward(params, atom, src, tgt):
    def conv(x, w):
        return lax.conv_general_dilated(x, w, (1, 1), "SAME",
                                        dimension_numbers=("NHWC", "HWIO", "NHWC"))
    node_out = conv(atom, params["w_node_hwio"])
    edge_out = conv(atom, params["w_edge_hwio"])
    z = _elu(node_out[src] * edge_out[tgt])
    lin = conv(z, params["w_lin_hwio"]) + params["b_lin"].reshape(1, 1, 1, -1)
    msg = _sigmoid(lin[..., :16]) * _softplus(lin[..., 16:])
    out0 = atom.at[src].add(msg)
    mean = jnp.mean(out0, axis=(0, 1, 2), keepdims=True)
    var = jnp.mean((out0 - mean) ** 2, axis=(0, 1, 2), keepdims=True)
    bn = (out0 - mean) * lax.rsqrt(var + 1e-5)
    return _softplus(atom + bn)


if __name__ == "__main__":
    key = jax.random.PRNGKey(0)
    kp, kx, ks, kt = jax.random.split(key, 4)

    # N atoms with 8x8 spatial maps of 16 channels (Conv2d(16,32) fixes C=16), E edges
    N, H, W, C, E = 8, 8, 8, 16, 20
    params = init_params(kp, W=W, Cin=C)
    atom = jax.random.normal(kx, (N, H, W, C), jnp.float32)   # NHWC (torch: (N,16,H,W))
    edge_sources = jax.random.randint(ks, (E,), 0, N, dtype=jnp.int32)
    edge_targets = jax.random.randint(kt, (E,), 0, N, dtype=jnp.int32)

    out = conv_layer_forward(params, atom, edge_sources, edge_targets)
    out = jax.block_until_ready(out)

    ref = reference_forward(params, atom, edge_sources, edge_targets)
    assert out.shape == (N, H, W, C)
    err = float(jnp.max(jnp.abs(out - ref)))
    assert jnp.allclose(out, ref, rtol=1e-4, atol=1e-4), err
    print("KERNEL_OK")
</pallas_src>

<mosaic_0001>
module attributes {stable_mosaic.version = 11 : i64} {
  func.func @_fused_conv_kernel(%arg0: i32, %arg1: memref<8x8x128xf32, #tpu.memory_space<vmem>>, %arg2: memref<3x128x256xf32, #tpu.memory_space<vmem>>, %arg3: memref<8x8x128xf32, #tpu.memory_space<vmem>>, %arg4: memref<8x8x128xf32, #tpu.memory_space<vmem>>, %arg5: memref<8x10x128xf32, #tpu.memory_space<vmem>>) attributes {dimension_semantics = [#tpu.dimension_semantics<parallel>], iteration_bounds = array<i64: 1>, scalar_prefetch = 0 : i64, scratch_operands = 1 : i64, tpu.core_type = #tpu.core_type<tc>, window_params = [{transform_indices = @transform_0, window_bounds = array<i64: 8, 8, 128>}, {pipeline_mode = #tpu.pipeline_mode<synchronous>, transform_indices = @transform_1, window_bounds = array<i64: 3, 128, 256>}, {transform_indices = @transform_2, window_bounds = array<i64: 8, 8, 128>}, {transform_indices = @transform_3, window_bounds = array<i64: 8, 8, 128>}]} {
    %c0_i32 = arith.constant 0 : i32
    %0 = arith.cmpi eq, %arg0, %c0_i32 : i32
    %1 = arith.extui %0 : i1 to i32
    %c0_i32_0 = arith.constant 0 : i32
    %2 = arith.cmpi ne, %1, %c0_i32_0 : i32
    scf.if %2 {
      %cst_31 = arith.constant 0.000000e+00 : f32
      %30 = vector.broadcast %cst_31 : f32 to vector<8x1x128xf32>
      %c0_32 = arith.constant 0 : index
      %c0_33 = arith.constant 0 : index
      %c0_34 = arith.constant 0 : index
      %31 = vector.load %arg5[%c0_32, %c0_33, %c0_34] : memref<8x10x128xf32, #tpu.memory_space<vmem>>, vector<8x1x128xf32>
      tpu.vector_store %arg5[%c0_32, %c0_33, %c0_34], %30 {strides = array<i32>} : memref<8x10x128xf32, #tpu.memory_space<vmem>>, vector<8x1x128xf32>,
      %cst_35 = arith.constant 0.000000e+00 : f32
      %32 = vector.broadcast %cst_35 : f32 to vector<8x1x128xf32>
      %c0_36 = arith.constant 0 : index
      %c9 = arith.constant 9 : index
      %c0_37 = arith.constant 0 : index
      %33 = vector.load %arg5[%c0_36, %c9, %c0_37] : memref<8x10x128xf32, #tpu.memory_space<vmem>>, vector<8x1x128xf32>
      tpu.vector_store %arg5[%c0_36, %c9, %c0_37], %32 {strides = array<i32>} : memref<8x10x128xf32, #tpu.memory_space<vmem>>, vector<8x1x128xf32>,
    } else {
    }
    %c0 = arith.constant 0 : index
    %c0_1 = arith.constant 0 : index
    %c0_2 = arith.constant 0 : index
    %3 = vector.load %arg1[%c0, %c0_1, %c0_2] : memref<8x8x128xf32, #tpu.memory_space<vmem>>, vector<8x8x128xf32>
    %c0_3 = arith.constant 0 : index
    %c1 = arith.constant 1 : index
    %c0_4 = arith.constant 0 : index
    %4 = vector.load %arg5[%c0_3, %c1, %c0_4] : memref<8x10x128xf32, #tpu.memory_space<vmem>>, vector<8x8x128xf32>
    tpu.vector_store %arg5[%c0_3, %c1, %c0_4], %3 {strides = array<i32>} : memref<8x10x128xf32, #tpu.memory_space<vmem>>, vector<8x8x128xf32>,
    %cst = arith.constant 0.000000e+00 : f32
    %5 = vector.broadcast %cst : f32 to vector<64x256xf32>
    %c0_5 = arith.constant 0 : index
    %c0_6 = arith.constant 0 : index
    %c0_7 = arith.constant 0 : index
    %6 = vector.load %arg5[%c0_5, %c0_6, %c0_7] : memref<8x10x128xf32, #tpu.memory_space<vmem>>, vector<8x8x128xf32>
    %7 = vector.shape_cast %6 : vector<8x8x128xf32> to vector<64x128xf32>
    %c0_8 = arith.constant 0 : index
    %c0_9 = arith.constant 0 : index
    %c0_10 = arith.constant 0 : index
    %8 = vector.load %arg2[%c0_8, %c0_9, %c0_10] : memref<3x128x256xf32, #tpu.memory_space<vmem>>, vector<1x128x256xf32>
    %9 = vector.shape_cast %8 : vector<1x128x256xf32> to vector<128x256xf32>
    %cst_11 = arith.constant dense<0.000000e+00> : vector<64x256xf32>
    %10 = tpu.matmul %7, %9, %cst_11 {dimension_numbers = #tpu.dot_dimension_numbers<[1], [0], [0], [1], [0, 0, 1, 1], [], []>} : vector<64x128xf32>, vector<128x256xf32>, vector<64x256xf32> -> vector<64x256xf32>
    %11 = arith.addf %5, %10 : vector<64x256xf32>
    %c0_12 = arith.constant 0 : index
    %c1_13 = arith.constant 1 : index
    %c0_14 = arith.constant 0 : index
    %12 = vector.load %arg5[%c0_12, %c1_13, %c0_14] : memref<8x10x128xf32, #tpu.memory_space<vmem>>, vector<8x8x128xf32>
    %13 = vector.shape_cast %12 : vector<8x8x128xf32> to vector<64x128xf32>
    %c1_15 = arith.constant 1 : index
    %c0_16 = arith.constant 0 : index
    %c0_17 = arith.constant 0 : index
    %14 = vector.load %arg2[%c1_15, %c0_16, %c0_17] : memref<3x128x256xf32, #tpu.memory_space<vmem>>, vector<1x128x256xf32>
    %15 = vector.shape_cast %14 : vector<1x128x256xf32> to vector<128x256xf32>
    %cst_18 = arith.constant dense<0.000000e+00> : vector<64x256xf32>
    %16 = tpu.matmul %13, %15, %cst_18 {dimension_numbers = #tpu.dot_dimension_numbers<[1], [0], [0], [1], [0, 0, 1, 1], [], []>} : vector<64x128xf32>, vector<128x256xf32>, vector<64x256xf32> -> vector<64x256xf32>
    %17 = arith.addf %11, %16 : vector<64x256xf32>
    %c0_19 = arith.constant 0 : index
    %c2 = arith.constant 2 : index
    %c0_20 = arith.constant 0 : index
    %18 = vector.load %arg5[%c0_19, %c2, %c0_20] : memref<8x10x128xf32, #tpu.memory_space<vmem>>, vector<8x8x128xf32>
    %19 = vector.shape_cast %18 : vector<8x8x128xf32> to vector<64x128xf32>
    %c2_21 = arith.constant 2 : index
    %c0_22 = arith.constant 0 : index
    %c0_23 = arith.constant 0 : index
    %20 = vector.load %arg2[%c2_21, %c0_22, %c0_23] : memref<3x128x256xf32, #tpu.memory_space<vmem>>, vector<1x128x256xf32>
    %21 = vector.shape_cast %20 : vector<1x128x256xf32> to vector<128x256xf32>
    %cst_24 = arith.constant dense<0.000000e+00> : vector<64x256xf32>
    %22 = tpu.matmul %19, %21, %cst_24 {dimension_numbers = #tpu.dot_dimension_numbers<[1], [0], [0], [1], [0, 0, 1, 1], [], []>} : vector<64x128xf32>, vector<128x256xf32>, vector<64x256xf32> -> vector<64x256xf32>
    %23 = arith.addf %17, %22 : vector<64x256xf32>
    %24 = vector.extract_strided_slice %23 {offsets = [0, 0], sizes = [64, 128], strides = [1, 1]} : vector<64x256xf32> to vector<64x128xf32>
    %25 = vector.shape_cast %24 : vector<64x128xf32> to vector<8x8x128xf32>
    %c0_25 = arith.constant 0 : index
    %c0_26 = arith.constant 0 : index
    %c0_27 = arith.constant 0 : index
    %26 = vector.load %arg3[%c0_25, %c0_26, %c0_27] : memref<8x8x128xf32, #tpu.memory_space<vmem>>, vector<8x8x128xf32>
    tpu.vector_store %arg3[%c0_25, %c0_26, %c0_27], %25 {strides = array<i32>} : memref<8x8x128xf32, #tpu.memory_space<vmem>>, vector<8x8x128xf32>,
    %27 = vector.extract_strided_slice %23 {offsets = [0, 128], sizes = [64, 128], strides = [1, 1]} : vector<64x256xf32> to vector<64x128xf32>
    %28 = vector.shape_cast %27 : vector<64x128xf32> to vector<8x8x128xf32>
    %c0_28 = arith.constant 0 : index
    %c0_29 = arith.constant 0 : index
    %c0_30 = arith.constant 0 : index
    %29 = vector.load %arg4[%c0_28, %c0_29, %c0_30] : memref<8x8x128xf32, #tpu.memory_space<vmem>>, vector<8x8x128xf32>
    tpu.vector_store %arg4[%c0_28, %c0_29, %c0_30], %28 {strides = array<i32>} : memref<8x8x128xf32, #tpu.memory_space<vmem>>, vector<8x8x128xf32>,
    return
  }
  func.func @transform_0(%arg0: i32) -> (i32, i32, i32) {
    %c0_i32 = arith.constant 0 : i32
    %c0_i32_0 = arith.constant 0 : i32
    %c0_i32_1 = arith.constant 0 : i32
    return %arg0, %c0_i32, %c0_i32_0 : i32, i32, i32
  }
  func.func @transform_1(%arg0: i32) -> (i32, i32, i32) {
    %c0_i32 = arith.constant 0 : i32
    %c0_i32_0 = arith.constant 0 : i32
    %c0_i32_1 = arith.constant 0 : i32
    %c0_i32_2 = arith.constant 0 : i32
    return %c0_i32, %c0_i32_0, %c0_i32_1 : i32, i32, i32
  }
  func.func @transform_2(%arg0: i32) -> (i32, i32, i32) {
    %c0_i32 = arith.constant 0 : i32
    %c0_i32_0 = arith.constant 0 : i32
    %c0_i32_1 = arith.constant 0 : i32
    return %arg0, %c0_i32, %c0_i32_0 : i32, i32, i32
  }
  func.func @transform_3(%arg0: i32) -> (i32, i32, i32) {
    %c0_i32 = arith.constant 0 : i32
    %c0_i32_0 = arith.constant 0 : i32
    %c0_i32_1 = arith.constant 0 : i32
    return %arg0, %c0_i32, %c0_i32_0 : i32, i32, i32
  }
}

</mosaic_0001>

<llo_original>
// kernel: tpu_custom_call.1
$region0: #{tpu_custom_call.1}
  #allocation0 [shape = 'u32[]', space=smem, size = 0x4, offset = 0x4, fixed_abs, tag = 'smem constant byte address 0x4 - core index']
  #allocation1 [shape = 'u32[72,128]{1,0:T(1,128)}', space=vmem, size = 0x9000, scoped, tag = 'internal scratch']
  #allocation2 [shape = 'f32[8,10,128]{2,1,0:T(8,128)}', space=vmem, size = 0x10000, scoped, tag = 'scratch operand']
  %s0 = inlined_call_operand.hbm [shape: f32[8,8,128], index: 0, kind: input, shape index: {}]
  %s1 = inlined_call_operand.hbm [shape: f32[3,128,256], index: 1, kind: input, shape index: {}]
  %s2 = inlined_call_operand.hbm [shape: f32[8,8,128], index: 2, kind: output, shape index: {0}]
  %s3 = inlined_call_operand.hbm [shape: f32[8,8,128], index: 3, kind: output, shape index: {1}]
  %4 = xla_tuple %s2, %s3
  %s5 = sld [smem:[#allocation0]]
  $region38: #{tpu_custom_call.1} parent=0
    _
  %s7 = ssub.s32 1, %s5
  %s8 = scalar_select 0, %s7, %s5
  $region1: #{tpu_custom_call.1} parent=0
    #allocation3 [shape = 'u8[32768]{0}', space=vmem, size = 0x8000, scoped, tag = 'input window, operand 0, single buffered']
    #allocation4 [shape = 's32[1]{0}', space=sflag, size = 0x4, scoped, tag = 'scoped memory for tpu_custom_call.1']
    #allocation5 [shape = 's32[1]{0}', space=sflag, size = 0x4, scoped, tag = 'scoped memory for tpu_custom_call.1']
    #allocation6 [shape = 'u8[393216]{0}', space=vmem, size = 0x60000, scoped, tag = 'input window, operand 1, single buffered']
    #allocation7 [shape = 's32[1]{0}', space=sflag, size = 0x4, scoped, tag = 'scoped memory for tpu_custom_call.1']
    #allocation8 [shape = 'u8[32768]{0}', space=vmem, size = 0x8000, scoped, tag = 'output window, operand 0, single buffered']
    #allocation9 [shape = 'u8[32768]{0}', space=vmem, size = 0x8000, scoped, tag = 'output window, operand 1, single buffered']
    #allocation10 [shape = 's32[1]{0}', space=sflag, size = 0x4, scoped, tag = 'scoped memory for tpu_custom_call.1']
    %9 = vsyncpa [#allocation4], 0
    %10 = vsyncpa [#allocation7], 0
    %11 = vsyncpa [#allocation5], 0
    %12 = vsyncpa [#allocation10], 0
    // Predicated region
    $region2: #{tpu_custom_call.1} parent=1 // pred_check
      _
    $region3: #{tpu_custom_call.1} parent=1 // pred_check_branch
      %14 = sbr.rel (0) target = $region5
    $region4: #{tpu_custom_call.1} parent=1 // pred_region
      %16 = vsyncadd [#allocation4], 0
      %s17 = sshll.u32 %s0, 4
      %s18 = int_to_ptr.hbm [resolvable:$true] %s17
      %s19 = sshll.u32 [#allocation3], 4
      %s20 = int_to_ptr.vmem [resolvable:$true] %s19
      %25 = dma.hbm_to_vmem [thread:$0]  %s18, 1024, %s20, [#allocation4], 128, 128, 8
    $region5: #{tpu_custom_call.1} parent=1 // pred_fallthru
      _
    // Predicated region
    $region6: #{tpu_custom_call.1} parent=1 // pred_check
      _
    $region7: #{tpu_custom_call.1} parent=1 // pred_check_branch
      %27 = sbr.rel (0) target = $region9
    $region8: #{tpu_custom_call.1} parent=1 // pred_region
      %29 = vsyncadd [#allocation7], 0
      %s30 = sshll.u32 %s1, 4
      %s31 = int_to_ptr.hbm [resolvable:$true] %s30
      %s32 = sshll.u32 [#allocation6], 4
      %s33 = int_to_ptr.vmem [resolvable:$true] %s32
      %38 = dma.hbm_to_vmem [thread:$0]  %s31, 12288, %s33, [#allocation7], 256, 256, 16
    $region9: #{tpu_custom_call.1} parent=1 // pred_fallthru
      _
    // Predicated region
    $region10: #{tpu_custom_call.1} parent=1 // pred_check
      _
    $region11: #{tpu_custom_call.1} parent=1 // pred_check_branch
      %40 = sbr.rel (0) target = $region13
    $region12: #{tpu_custom_call.1} parent=1 // pred_region
      %42 = dma.done [#allocation4], 1024
    $region13: #{tpu_custom_call.1} parent=1 // pred_fallthru
      _
    // Predicated region
    $region14: #{tpu_custom_call.1} parent=1 // pred_check
      _
    $region15: #{tpu_custom_call.1} parent=1 // pred_check_branch
      %44 = sbr.rel (0) target = $region17
    $region16: #{tpu_custom_call.1} parent=1 // pred_region
      %46 = dma.done [#allocation7], 12288
    $region17: #{tpu_custom_call.1} parent=1 // pred_fallthru
      _
    %p47 = scmp.eq.s32.totalorder 0, 0
    // Predicated region
    $region18: #{tpu_custom_call.1} parent=1 // pred_check
      %p48 = pneg %p47
    $region19: #{tpu_custom_call.1} parent=1 // pred_check_branch
      %50 = sbr.rel (%p48) target = $region21
    $region20: #{tpu_custom_call.1} parent=1 // pred_region
      %51 = vst [vmem:[#allocation2] sm:$0x1] 0.0
      %52 = vst [vmem:[#allocation2 + $0x10] sm:$0x1] 0.0
      %53 = vst [vmem:[#allocation2 + $0x20] sm:$0x1] 0.0
      %54 = vst [vmem:[#allocation2 + $0x30] sm:$0x1] 0.0
      %55 = vst [vmem:[#allocation2 + $0x40] sm:$0x1] 0.0
      %56 = vst [vmem:[#allocation2 + $0x50] sm:$0x1] 0.0
      %57 = vst [vmem:[#allocation2 + $0x60] sm:$0x1] 0.0
      %58 = vst [vmem:[#allocation2 + $0x70] sm:$0x1] 0.0
      %59 = vst [vmem:[#allocation2 + $0x9] sm:$0x1] 0.0
      %60 = vst [vmem:[#allocation2 + $0x19] sm:$0x1] 0.0
      %61 = vst [vmem:[#allocation2 + $0x29] sm:$0x1] 0.0
      %62 = vst [vmem:[#allocation2 + $0x39] sm:$0x1] 0.0
      %63 = vst [vmem:[#allocation2 + $0x49] sm:$0x1] 0.0
      %64 = vst [vmem:[#allocation2 + $0x59] sm:$0x1] 0.0
      %65 = vst [vmem:[#allocation2 + $0x69] sm:$0x1] 0.0
      %66 = vst [vmem:[#allocation2 + $0x79] sm:$0x1] 0.0
    $region21: #{tpu_custom_call.1} parent=1 // pred_fallthru
      _
    %v67 = vld [vmem:[#allocation3] sm:$0xff]
    %v68 = vld [vmem:[#allocation3 + $0x8] sm:$0xff]
    %v69 = vld [vmem:[#allocation3 + $0x10] sm:$0xff]
    %v70 = vld [vmem:[#allocation3 + $0x18] sm:$0xff]
    %v71 = vld [vmem:[#allocation3 + $0x20] sm:$0xff]
    %v72 = vld [vmem:[#allocation3 + $0x28] sm:$0xff]
    %v73 = vld [vmem:[#allocation3 + $0x30] sm:$0xff]
    %v74 = vld [vmem:[#allocation3 + $0x38] sm:$0xff]
    %75 = vst [vmem:[#allocation2 + $0x1] sm:$0xff] %v67
    %76 = vst [vmem:[#allocation2 + $0x11] sm:$0xff] %v68
    %77 = vst [vmem:[#allocation2 + $0x21] sm:$0xff] %v69
    %78 = vst [vmem:[#allocation2 + $0x31] sm:$0xff] %v70
    %79 = vst [vmem:[#allocation2 + $0x41] sm:$0xff] %v71
    %80 = vst [vmem:[#allocation2 + $0x51] sm:$0xff] %v72
    %81 = vst [vmem:[#allocation2 + $0x61] sm:$0xff] %v73
    %82 = vst [vmem:[#allocation2 + $0x71] sm:$0xff] %v74
    %v83 = vld [vmem:[#allocation2] sm:$0xff]
    %v84 = vld [vmem:[#allocation2 + $0x10] sm:$0xff]
    %v85 = vld [vmem:[#allocation2 + $0x20] sm:$0xff]
    %v86 = vld [vmem:[#allocation2 + $0x30] sm:$0xff]
    %v87 = vld [vmem:[#allocation2 + $0x40] sm:$0xff]
    %v88 = vld [vmem:[#allocation2 + $0x50] sm:$0xff]
    %v89 = vld [vmem:[#allocation2 + $0x60] sm:$0xff]
    %v90 = vld [vmem:[#allocation2 + $0x70] sm:$0xff]
    %v91 = vld [vmem:[#allocation6] sm:$0xff]
    %v92 = vld [vmem:[#allocation6 + $0x8] sm:$0xff]
    %v93 = vld [vmem:[#allocation6 + $0x10] sm:$0xff]
    %v94 = vld [vmem:[#allocation6 + $0x18] sm:$0xff]
    %v95 = vld [vmem:[#allocation6 + $0x20] sm:$0xff]
    %v96 = vld [vmem:[#allocation6 + $0x28] sm:$0xff]
    %v97 = vld [vmem:[#allocation6 + $0x30] sm:$0xff]
    %v98 = vld [vmem:[#allocation6 + $0x38] sm:$0xff]
    %v99 = vld [vmem:[#allocation6 + $0x40] sm:$0xff]
    %v100 = vld [vmem:[#allocation6 + $0x48] sm:$0xff]
    %v101 = vld [vmem:[#allocation6 + $0x50] sm:$0xff]
    %v102 = vld [vmem:[#allocation6 + $0x58] sm:$0xff]
    %v103 = vld [vmem:[#allocation6 + $0x60] sm:$0xff]
    %v104 = vld [vmem:[#allocation6 + $0x68] sm:$0xff]
    %v105 = vld [vmem:[#allocation6 + $0x70] sm:$0xff]
    %v106 = vld [vmem:[#allocation6 + $0x78] sm:$0xff]
    %v107 = vld [vmem:[#allocation6 + $0x80] sm:$0xff]
    %v108 = vld [vmem:[#allocation6 + $0x88] sm:$0xff]
    %v109 = vld [vmem:[#allocation6 + $0x90] sm:$0xff]
    %v110 = vld [vmem:[#allocation6 + $0x98] sm:$0xff]
    %v111 = vld [vmem:[#allocation6 + $0xa0] sm:$0xff]
    %v112 = vld [vmem:[#allocation6 + $0xa8] sm:$0xff]
    %v113 = vld [vmem:[#allocation6 + $0xb0] sm:$0xff]
    %v114 = vld [vmem:[#allocation6 + $0xb8] sm:$0xff]
    %v115 = vld [vmem:[#allocation6 + $0xc0] sm:$0xff]
    %v116 = vld [vmem:[#allocation6 + $0xc8] sm:$0xff]
    %v117 = vld [vmem:[#allocation6 + $0xd0] sm:$0xff]
    %v118 = vld [vmem:[#allocation6 + $0xd8] sm:$0xff]
    %v119 = vld [vmem:[#allocation6 + $0xe0] sm:$0xff]
    %v120 = vld [vmem:[#allocation6 + $0xe8] sm:$0xff]
    %v121 = vld [vmem:[#allocation6 + $0xf0] sm:$0xff]
    %v122 = vld [vmem:[#allocation6 + $0xf8] sm:$0xff]
    %v123 = vld [vmem:[#allocation2 + $0x1] sm:$0xff]
    %v124 = vld [vmem:[#allocation2 + $0x11] sm:$0xff]
    %v125 = vld [vmem:[#allocation2 + $0x21] sm:$0xff]
    %v126 = vld [vmem:[#allocation2 + $0x31] sm:$0xff]
    %v127 = vld [vmem:[#allocation2 + $0x41] sm:$0xff]
    %v128 = vld [vmem:[#allocation2 + $0x51] sm:$0xff]
    %v129 = vld [vmem:[#allocation2 + $0x61] sm:$0xff]
    %v130 = vld [vmem:[#allocation2 + $0x71] sm:$0xff]
    %s131 = scalar_lea.vmem [#allocation6], 256
    %v132 = vld [vmem:[%s131] sm:$0xff]
    %v133 = vld [vmem:[%s131 + $0x8] sm:$0xff]
    %v134 = vld [vmem:[%s131 + $0x10] sm:$0xff]
    %v135 = vld [vmem:[%s131 + $0x18] sm:$0xff]
    %v136 = vld [vmem:[%s131 + $0x20] sm:$0xff]
    %v137 = vld [vmem:[%s131 + $0x28] sm:$0xff]
    %v138 = vld [vmem:[%s131 + $0x30] sm:$0xff]
    %v139 = vld [vmem:[%s131 + $0x38] sm:$0xff]
    %v140 = vld [vmem:[%s131 + $0x40] sm:$0xff]
    %v141 = vld [vmem:[%s131 + $0x48] sm:$0xff]
    %v142 = vld [vmem:[%s131 + $0x50] sm:$0xff]
    %v143 = vld [vmem:[%s131 + $0x58] sm:$0xff]
    %v144 = vld [vmem:[%s131 + $0x60] sm:$0xff]
    %v145 = vld [vmem:[%s131 + $0x68] sm:$0xff]
    %v146 = vld [vmem:[%s131 + $0x70] sm:$0xff]
    %v147 = vld [vmem:[%s131 + $0x78] sm:$0xff]
    %v148 = vld [vmem:[%s131 + $0x80] sm:$0xff]
    %v149 = vld [vmem:[%s131 + $0x88] sm:$0xff]
    %v150 = vld [vmem:[%s131 + $0x90] sm:$0xff]
    %v151 = vld [vmem:[%s131 + $0x98] sm:$0xff]
    %v152 = vld [vmem:[%s131 + $0xa0] sm:$0xff]
    %v153 = vld [vmem:[%s131 + $0xa8] sm:$0xff]
    %v154 = vld [vmem:[%s131 + $0xb0] sm:$0xff]
    %v155 = vld [vmem:[%s131 + $0xb8] sm:$0xff]
    %v156 = vld [vmem:[%s131 + $0xc0] sm:$0xff]
    %v157 = vld [vmem:[%s131 + $0xc8] sm:$0xff]
    %v158 = vld [vmem:[%s131 + $0xd0] sm:$0xff]
    %v159 = vld [vmem:[%s131 + $0xd8] sm:$0xff]
    %v160 = vld [vmem:[%s131 + $0xe0] sm:$0xff]
    %v161 = vld [vmem:[%s131 + $0xe8] sm:$0xff]
    %v162 = vld [vmem:[%s131 + $0xf0] sm:$0xff]
    %v163 = vld [vmem:[%s131 + $0xf8] sm:$0xff]
    %164 = vmatpush.msra.mxu0 %v162
    %165 = vmatpush.msra.mxu0 %v160
    %166 = vmatpush.msra.mxu0 %v158
    %167 = vmatpush.msra.mxu0 %v156
    %168 = vmatpush.msra.mxu0 %v154
    %169 = vmatpush.msra.mxu0 %v152
    %170 = vmatpush.msra.mxu0 %v150
    %171 = vmatpush.msra.mxu0 %v148
    %172 = vmatpush.msra.mxu0 %v146
    %173 = vmatpush.msra.mxu0 %v144
    %174 = vmatpush.msra.mxu0 %v142
    %175 = vmatpush.msra.mxu0 %v140
    %176 = vmatpush.msra.mxu0 %v138
    %177 = vmatpush.msra.mxu0 %v136
    %178 = vmatpush.msra.mxu0 %v134
    %179 = vmatpush.msra.mxu0 %v132
    %180 = vmatmul.f32.gmra.mxu0 %v123
    %v181 = vpop.f32.mrf.mxu0
    %v182 = vadd.f32 0.0, %v181
    %183 = vmatmul.f32.gmra.mxu0 %v124
    %v184 = vpop.f32.mrf.mxu0
    %v185 = vadd.f32 0.0, %v184
    %186 = vmatmul.f32.gmra.mxu0 %v125
    %v187 = vpop.f32.mrf.mxu0
    %v188 = vadd.f32 0.0, %v187
    %189 = vmatmul.f32.gmra.mxu0 %v126
    %v190 = vpop.f32.mrf.mxu0
    %v191 = vadd.f32 0.0, %v190
    %192 = vmatmul.f32.gmra.mxu0 %v127
    %v193 = vpop.f32.mrf.mxu0
    %v194 = vadd.f32 0.0, %v193
    %195 = vmatmul.f32.gmra.mxu0 %v128
    %v196 = vpop.f32.mrf.mxu0
    %v197 = vadd.f32 0.0, %v196
    %198 = vmatmul.f32.gmra.mxu0 %v129
    %v199 = vpop.f32.mrf.mxu0
    %v200 = vadd.f32 0.0, %v199
    %201 = vmatmul.f32.gmra.mxu0 %v130
    %v202 = vpop.f32.mrf.mxu0
    %v203 = vadd.f32 0.0, %v202
    %204 = vdwg.mxu0
    %205 = vmatpush.msra.mxu0 %v163
    %206 = vmatpush.msra.mxu0 %v161
    %207 = vmatpush.msra.mxu0 %v159
    %208 = vmatpush.msra.mxu0 %v157
    %209 = vmatpush.msra.mxu0 %v155
    %210 = vmatpush.msra.mxu0 %v153
    %211 = vmatpush.msra.mxu0 %v151
    %212 = vmatpush.msra.mxu0 %v149
    %213 = vmatpush.msra.mxu0 %v147
    %214 = vmatpush.msra.mxu0 %v145
    %215 = vmatpush.msra.mxu0 %v143
    %216 = vmatpush.msra.mxu0 %v141
    %217 = vmatpush.msra.mxu0 %v139
    %218 = vmatpush.msra.mxu0 %v137
    %219 = vmatpush.msra.mxu0 %v135
    %220 = vmatpush.msra.mxu0 %v133
    %221 = vmatmul.f32.gmra.mxu0 %v123
    %v222 = vpop.f32.mrf.mxu0
    %v223 = vadd.f32 0.0, %v222
    %224 = vmatmul.f32.gmra.mxu0 %v124
    %v225 = vpop.f32.mrf.mxu0
    %v226 = vadd.f32 0.0, %v225
    %227 = vmatmul.f32.gmra.mxu0 %v125
    %v228 = vpop.f32.mrf.mxu0
    %v229 = vadd.f32 0.0, %v228
    %230 = vmatmul.f32.gmra.mxu0 %v126
    %v231 = vpop.f32.mrf.mxu0
    %v232 = vadd.f32 0.0, %v231
    %233 = vmatmul.f32.gmra.mxu0 %v127
    %v234 = vpop.f32.mrf.mxu0
    %v235 = vadd.f32 0.0, %v234
    %236 = vmatmul.f32.gmra.mxu0 %v128
    %v237 = vpop.f32.mrf.mxu0
    %v238 = vadd.f32 0.0, %v237
    %239 = vmatmul.f32.gmra.mxu0 %v129
    %v240 = vpop.f32.mrf.mxu0
    %v241 = vadd.f32 0.0, %v240
    %242 = vmatmul.f32.gmra.mxu0 %v130
    %v243 = vpop.f32.mrf.mxu0
    %v244 = vadd.f32 0.0, %v243
    %245 = vdwg.mxu0
    %246 = vmatpush.msra.mxu0 %v121
    %247 = vmatpush.msra.mxu0 %v119
    %248 = vmatpush.msra.mxu0 %v117
    %249 = vmatpush.msra.mxu0 %v115
    %250 = vmatpush.msra.mxu0 %v113
    %251 = vmatpush.msra.mxu0 %v111
    %252 = vmatpush.msra.mxu0 %v109
    %253 = vmatpush.msra.mxu0 %v107
    %254 = vmatpush.msra.mxu0 %v105
    %255 = vmatpush.msra.mxu0 %v103
    %256 = vmatpush.msra.mxu0 %v101
    %257 = vmatpush.msra.mxu0 %v99
    %258 = vmatpush.msra.mxu0 %v97
    %259 = vmatpush.msra.mxu0 %v95
    %260 = vmatpush.msra.mxu0 %v93
    %261 = vmatpush.msra.mxu0 %v91
    %262 = vmatmul.f32.gmra.mxu0 %v83
    %v263 = vpop.f32.mrf.mxu0
    %v264 = vadd.f32 %v182, %v263
    %265 = vmatmul.f32.gmra.mxu0 %v84
    %v266 = vpop.f32.mrf.mxu0
    %v267 = vadd.f32 %v185, %v266
    %268 = vmatmul.f32.gmra.mxu0 %v85
    %v269 = vpop.f32.mrf.mxu0
    %v270 = vadd.f32 %v188, %v269
    %271 = vmatmul.f32.gmra.mxu0 %v86
    %v272 = vpop.f32.mrf.mxu0
    %v273 = vadd.f32 %v191, %v272
    %274 = vmatmul.f32.gmra.mxu0 %v87
    %v275 = vpop.f32.mrf.mxu0
    %v276 = vadd.f32 %v194, %v275
    %277 = vmatmul.f32.gmra.mxu0 %v88
    %v278 = vpop.f32.mrf.mxu0
    %v279 = vadd.f32 %v197, %v278
    %280 = vmatmul.f32.gmra.mxu0 %v89
    %v281 = vpop.f32.mrf.mxu0
    %v282 = vadd.f32 %v200, %v281
    %283 = vmatmul.f32.gmra.mxu0 %v90
    %v284 = vpop.f32.mrf.mxu0
    %v285 = vadd.f32 %v203, %v284
    %286 = vdwg.mxu0
    %287 = vmatpush.msra.mxu0 %v122
    %288 = vmatpush.msra.mxu0 %v120
    %289 = vmatpush.msra.mxu0 %v118
    %290 = vmatpush.msra.mxu0 %v116
    %291 = vmatpush.msra.mxu0 %v114
    %292 = vmatpush.msra.mxu0 %v112
    %293 = vmatpush.msra.mxu0 %v110
    %294 = vmatpush.msra.mxu0 %v108
    %295 = vmatpush.msra.mxu0 %v106
    %296 = vmatpush.msra.mxu0 %v104
    %297 = vmatpush.msra.mxu0 %v102
    %298 = vmatpush.msra.mxu0 %v100
    %299 = vmatpush.msra.mxu0 %v98
    %300 = vmatpush.msra.mxu0 %v96
    %301 = vmatpush.msra.mxu0 %v94
    %302 = vmatpush.msra.mxu0 %v92
    %303 = vmatmul.f32.gmra.mxu0 %v83
    %v304 = vpop.f32.mrf.mxu0
    %v305 = vadd.f32 %v223, %v304
    %306 = vmatmul.f32.gmra.mxu0 %v84
    %v307 = vpop.f32.mrf.mxu0
    %v308 = vadd.f32 %v226, %v307
    %309 = vmatmul.f32.gmra.mxu0 %v85
    %v310 = vpop.f32.mrf.mxu0
    %v311 = vadd.f32 %v229, %v310
    %312 = vmatmul.f32.gmra.mxu0 %v86
    %v313 = vpop.f32.mrf.mxu0
    %v314 = vadd.f32 %v232, %v313
    %315 = vmatmul.f32.gmra.mxu0 %v87
    %v316 = vpop.f32.mrf.mxu0
    %v317 = vadd.f32 %v235, %v316
    %318 = vmatmul.f32.gmra.mxu0 %v88
    %v319 = vpop.f32.mrf.mxu0
    %v320 = vadd.f32 %v238, %v319
    %321 = vmatmul.f32.gmra.mxu0 %v89
    %v322 = vpop.f32.mrf.mxu0
    %v323 = vadd.f32 %v241, %v322
    %324 = vmatmul.f32.gmra.mxu0 %v90
    %v325 = vpop.f32.mrf.mxu0
    %v326 = vadd.f32 %v244, %v325
    %327 = vdwg.mxu0
    %v328 = vld [vmem:[#allocation2 + $0x2] sm:$0xff]
    %v329 = vld [vmem:[#allocation2 + $0x12] sm:$0xff]
    %v330 = vld [vmem:[#allocation2 + $0x22] sm:$0xff]
    %v331 = vld [vmem:[#allocation2 + $0x32] sm:$0xff]
    %v332 = vld [vmem:[#allocation2 + $0x42] sm:$0xff]
    %v333 = vld [vmem:[#allocation2 + $0x52] sm:$0xff]
    %v334 = vld [vmem:[#allocation2 + $0x62] sm:$0xff]
    %v335 = vld [vmem:[#allocation2 + $0x72] sm:$0xff]
    %s336 = scalar_lea.vmem [#allocation6], 512
    %v337 = vld [vmem:[%s336] sm:$0xff]
    %v338 = vld [vmem:[%s336 + $0x8] sm:$0xff]
    %v339 = vld [vmem:[%s336 + $0x10] sm:$0xff]
    %v340 = vld [vmem:[%s336 + $0x18] sm:$0xff]
    %v341 = vld [vmem:[%s336 + $0x20] sm:$0xff]
    %v342 = vld [vmem:[%s336 + $0x28] sm:$0xff]
    %v343 = vld [vmem:[%s336 + $0x30] sm:$0xff]
    %v344 = vld [vmem:[%s336 + $0x38] sm:$0xff]
    %v345 = vld [vmem:[%s336 + $0x40] sm:$0xff]
    %v346 = vld [vmem:[%s336 + $0x48] sm:$0xff]
    %v347 = vld [vmem:[%s336 + $0x50] sm:$0xff]
    %v348 = vld [vmem:[%s336 + $0x58] sm:$0xff]
    %v349 = vld [vmem:[%s336 + $0x60] sm:$0xff]
    %v350 = vld [vmem:[%s336 + $0x68] sm:$0xff]
    %v351 = vld [vmem:[%s336 + $0x70] sm:$0xff]
    %v352 = vld [vmem:[%s336 + $0x78] sm:$0xff]
    %v353 = vld [vmem:[%s336 + $0x80] sm:$0xff]
    %v354 = vld [vmem:[%s336 + $0x88] sm:$0xff]
    %v355 = vld [vmem:[%s336 + $0x90] sm:$0xff]
    %v356 = vld [vmem:[%s336 + $0x98] sm:$0xff]
    %v357 = vld [vmem:[%s336 + $0xa0] sm:$0xff]
    %v358 = vld [vmem:[%s336 + $0xa8] sm:$0xff]
    %v359 = vld [vmem:[%s336 + $0xb0] sm:$0xff]
    %v360 = vld [vmem:[%s336 + $0xb8] sm:$0xff]
    %v361 = vld [vmem:[%s336 + $0xc0] sm:$0xff]
    %v362 = vld [vmem:[%s336 + $0xc8] sm:$0xff]
    %v363 = vld [vmem:[%s336 + $0xd0] sm:$0xff]
    %v364 = vld [vmem:[%s336 + $0xd8] sm:$0xff]
    %v365 = vld [vmem:[%s336 + $0xe0] sm:$0xff]
    %v366 = vld [vmem:[%s336 + $0xe8] sm:$0xff]
    %v367 = vld [vmem:[%s336 + $0xf0] sm:$0xff]
    %v368 = vld [vmem:[%s336 + $0xf8] sm:$0xff]
    %369 = vmatpush.msra.mxu0 %v367
    %370 = vmatpush.msra.mxu0 %v365
    %371 = vmatpush.msra.mxu0 %v363
    %372 = vmatpush.msra.mxu0 %v361
    %373 = vmatpush.msra.mxu0 %v359
    %374 = vmatpush.msra.mxu0 %v357
    %375 = vmatpush.msra.mxu0 %v355
    %376 = vmatpush.msra.mxu0 %v353
    %377 = vmatpush.msra.mxu0 %v351
    %378 = vmatpush.msra.mxu0 %v349
    %379 = vmatpush.msra.mxu0 %v347
    %380 = vmatpush.msra.mxu0 %v345
    %381 = vmatpush.msra.mxu0 %v343
    %382 = vmatpush.msra.mxu0 %v341
    %383 = vmatpush.msra.mxu0 %v339
    %384 = vmatpush.msra.mxu0 %v337
    %385 = vmatmul.f32.gmra.mxu0 %v328
    %v386 = vpop.f32.mrf.mxu0
    %v387 = vadd.f32 0.0, %v386
    %388 = vmatmul.f32.gmra.mxu0 %v329
    %v389 = vpop.f32.mrf.mxu0
    %v390 = vadd.f32 0.0, %v389
    %391 = vmatmul.f32.gmra.mxu0 %v330
    %v392 = vpop.f32.mrf.mxu0
    %v393 = vadd.f32 0.0, %v392
    %394 = vmatmul.f32.gmra.mxu0 %v331
    %v395 = vpop.f32.mrf.mxu0
    %v396 = vadd.f32 0.0, %v395
    %397 = vmatmul.f32.gmra.mxu0 %v332
    %v398 = vpop.f32.mrf.mxu0
    %v399 = vadd.f32 0.0, %v398
    %400 = vmatmul.f32.gmra.mxu0 %v333
    %v401 = vpop.f32.mrf.mxu0
    %v402 = vadd.f32 0.0, %v401
    %403 = vmatmul.f32.gmra.mxu0 %v334
    %v404 = vpop.f32.mrf.mxu0
    %v405 = vadd.f32 0.0, %v404
    %406 = vmatmul.f32.gmra.mxu0 %v335
    %v407 = vpop.f32.mrf.mxu0
    %v408 = vadd.f32 0.0, %v407
    %409 = vdwg.mxu0
    %410 = vmatpush.msra.mxu0 %v368
    %411 = vmatpush.msra.mxu0 %v366
    %412 = vmatpush.msra.mxu0 %v364
    %413 = vmatpush.msra.mxu0 %v362
    %414 = vmatpush.msra.mxu0 %v360
    %415 = vmatpush.msra.mxu0 %v358
    %416 = vmatpush.msra.mxu0 %v356
    %417 = vmatpush.msra.mxu0 %v354
    %418 = vmatpush.msra.mxu0 %v352
    %419 = vmatpush.msra.mxu0 %v350
    %420 = vmatpush.msra.mxu0 %v348
    %421 = vmatpush.msra.mxu0 %v346
    %422 = vmatpush.msra.mxu0 %v344
    %423 = vmatpush.msra.mxu0 %v342
    %424 = vmatpush.msra.mxu0 %v340
    %425 = vmatpush.msra.mxu0 %v338
    %426 = vmatmul.f32.gmra.mxu0 %v328
    %v427 = vpop.f32.mrf.mxu0
    %v428 = vadd.f32 0.0, %v427
    %429 = vmatmul.f32.gmra.mxu0 %v329
    %v430 = vpop.f32.mrf.mxu0
    %v431 = vadd.f32 0.0, %v430
    %432 = vmatmul.f32.gmra.mxu0 %v330
    %v433 = vpop.f32.mrf.mxu0
    %v434 = vadd.f32 0.0, %v433
    %435 = vmatmul.f32.gmra.mxu0 %v331
    %v436 = vpop.f32.mrf.mxu0
    %v437 = vadd.f32 0.0, %v436
    %438 = vmatmul.f32.gmra.mxu0 %v332
    %v439 = vpop.f32.mrf.mxu0
    %v440 = vadd.f32 0.0, %v439
    %441 = vmatmul.f32.gmra.mxu0 %v333
    %v442 = vpop.f32.mrf.mxu0
    %v443 = vadd.f32 0.0, %v442
    %444 = vmatmul.f32.gmra.mxu0 %v334
    %v445 = vpop.f32.mrf.mxu0
    %v446 = vadd.f32 0.0, %v445
    %447 = vmatmul.f32.gmra.mxu0 %v335
    %v448 = vpop.f32.mrf.mxu0
    %v449 = vadd.f32 0.0, %v448
    %450 = vdwg.mxu0
    %v451 = vadd.f32 %v264, %v387
    %v452 = vadd.f32 %v305, %v428
    %v453 = vadd.f32 %v267, %v390
    %v454 = vadd.f32 %v308, %v431
    %v455 = vadd.f32 %v270, %v393
    %v456 = vadd.f32 %v311, %v434
    %v457 = vadd.f32 %v273, %v396
    %v458 = vadd.f32 %v314, %v437
    %v459 = vadd.f32 %v276, %v399
    %v460 = vadd.f32 %v317, %v440
    %v461 = vadd.f32 %v279, %v402
    %v462 = vadd.f32 %v320, %v443
    %v463 = vadd.f32 %v282, %v405
    %v464 = vadd.f32 %v323, %v446
    %v465 = vadd.f32 %v285, %v408
    %v466 = vadd.f32 %v326, %v449
    %467 = vst [vmem:[#allocation8] sm:$0xff] %v451
    %468 = vst [vmem:[#allocation8 + $0x8] sm:$0xff] %v453
    %469 = vst [vmem:[#allocation8 + $0x10] sm:$0xff] %v455
    %470 = vst [vmem:[#allocation8 + $0x18] sm:$0xff] %v457
    %471 = vst [vmem:[#allocation8 + $0x20] sm:$0xff] %v459
    %472 = vst [vmem:[#allocation8 + $0x28] sm:$0xff] %v461
    %473 = vst [vmem:[#allocation8 + $0x30] sm:$0xff] %v463
    %474 = vst [vmem:[#allocation8 + $0x38] sm:$0xff] %v465
    %475 = vst [vmem:[#allocation9] sm:$0xff] %v452
    %476 = vst [vmem:[#allocation9 + $0x8] sm:$0xff] %v454
    %477 = vst [vmem:[#allocation9 + $0x10] sm:$0xff] %v456
    %478 = vst [vmem:[#allocation9 + $0x18] sm:$0xff] %v458
    %479 = vst [vmem:[#allocation9 + $0x20] sm:$0xff] %v460
    %480 = vst [vmem:[#allocation9 + $0x28] sm:$0xff] %v462
    %481 = vst [vmem:[#allocation9 + $0x30] sm:$0xff] %v464
    %482 = vst [vmem:[#allocation9 + $0x38] sm:$0xff] %v466
    // Predicated region
    $region22: #{tpu_custom_call.1} parent=1 // pred_check
      _
    $region23: #{tpu_custom_call.1} parent=1 // pred_check_branch
      %484 = sbr.rel (0) target = $region25
    $region24: #{tpu_custom_call.1} parent=1 // pred_region
      %486 = vsyncadd [#allocation5], 0
      %s487 = sshll.u32 [#allocation8], 4
      %s488 = int_to_ptr.vmem [resolvable:$true] %s487
      %s489 = sshll.u32 %s2, 4
      %s490 = int_to_ptr.hbm [resolvable:$true] %s489
      %495 = dma.vmem_to_hbm [thread:$0]  %s488, 1024, %s490, [#allocation5], 128, 128, 8
    $region25: #{tpu_custom_call.1} parent=1 // pred_fallthru
      _
    // Predicated region
    $region26: #{tpu_custom_call.1} parent=1 // pred_check
      _
    $region27: #{tpu_custom_call.1} parent=1 // pred_check_branch
      %497 = sbr.rel (0) target = $region29
    $region28: #{tpu_custom_call.1} parent=1 // pred_region
      %499 = vsyncadd [#allocation10], 0
      %s500 = sshll.u32 [#allocation9], 4
      %s501 = int_to_ptr.vmem [resolvable:$true] %s500
      %s502 = sshll.u32 %s3, 4
      %s503 = int_to_ptr.hbm [resolvable:$true] %s502
      %508 = dma.vmem_to_hbm [thread:$0]  %s501, 1024, %s503, [#allocation10], 128, 128, 8
    $region29: #{tpu_custom_call.1} parent=1 // pred_fallthru
      _
    // Predicated region
    $region30: #{tpu_custom_call.1} parent=1 // pred_check
      _
    $region31: #{tpu_custom_call.1} parent=1 // pred_check_branch
      %510 = sbr.rel (0) target = $region33
    $region32: #{tpu_custom_call.1} parent=1 // pred_region
      %512 = dma.done [#allocation5], 1024
    $region33: #{tpu_custom_call.1} parent=1 // pred_fallthru
      _
    // Predicated region
    $region34: #{tpu_custom_call.1} parent=1 // pred_check
      _
    $region35: #{tpu_custom_call.1} parent=1 // pred_check_branch
      %514 = sbr.rel (0) target = $region37
    $region36: #{tpu_custom_call.1} parent=1 // pred_region
      %516 = dma.done [#allocation10], 1024
    $region37: #{tpu_custom_call.1} parent=1 // pred_fallthru
      _
    %517 = vsyncpa [#allocation4], 1
    %518 = vsyncpa [#allocation7], 1
    %519 = vsyncpa [#allocation5], 1
    %520 = vsyncpa [#allocation10], 1

</llo_original>
